<compile_context>
chip_gen: v5e
topology: v5e:2x2
jax: 0.10.0
libtpu: 0.0.40
codegen_flags: <defaults>
</compile_context>

<pallas_src>
import functools

import jax
import jax.numpy as jnp
from jax.experimental import pallas as pl
from jax.experimental.pallas import tpu as pltpu


# ---------------------------------------------------------------------------
# Fused per-tile forward kernel (TB images per grid step).
#   patches_ref: (TB*q, 128)   im2col rows, 4 pool quadrants packed on lanes
#   w1_ref:      (128, 128)    block-diag conv1 im2col weight (4x (Kpad,C))
#   s1/b1:       (1, 128)      fused BN(eval) affine for conv1, lane-tiled x4
#   wpw_ref:     (4, 128, 128) block-diag (replicated) pointwise block weights
#   spw/bpw:     (4, 1, 128)   fused BN affines for the blocks, lane-tiled x4
#   wbce_ref:    (128, NCpad)  pooling_bce weight^T (rows >= C are zero)
#   o_ref:       (TB, NCpad)   bce logits (sublane+lane dense)
# ---------------------------------------------------------------------------
def fused_forward_kernel(patches_ref, w1_ref, s1_ref, b1_ref,
                         wpw_ref, spw_ref, bpw_ref, wbce_ref, o_ref,
                         *, tb, q, c):
    # conv3x3 + BN + ReLU as one lane-dense (TB*q,128)@(128,128) matmul.
    x = patches_ref[...]                                          # (TB*q, 128)
    y = jnp.dot(x, w1_ref[...], preferred_element_type=jnp.float32)
    y = jnp.maximum(y * s1_ref[...] + b1_ref[...], 0.0)

    # 2x2 / stride-2 max pool: the 4 window quadrants live in the 4 lane
    # groups of width C; max over the cyclic lane rotations leaves every lane
    # group holding the pooled value (XLU rotations, free slot).
    z = jnp.maximum(jnp.maximum(y, pltpu.roll(y, c, axis=1)),
                    jnp.maximum(pltpu.roll(y, 2 * c, axis=1),
                                pltpu.roll(y, 3 * c, axis=1)))    # (TB*q, 128)

    # 4 pointwise residual blocks on the dense 128-lane slab:
    #   z = relu(z @ kron(I4, W) * scale + shift) + z
    for i in range(wpw_ref.shape[0]):
        h = jnp.dot(z, wpw_ref[i], preferred_element_type=jnp.float32)
        z = jnp.maximum(h * spw_ref[i] + bpw_ref[i], 0.0) + z

    # AdaptiveMaxPool2d((1,1)): per-image max over its contiguous q-row slab
    # (q is a multiple of 8 -> sublane-aligned slabs, no relayout).
    pooled = jnp.concatenate(
        [jnp.max(z[t * q:(t + 1) * q, :], axis=0, keepdims=True)
         for t in range(tb)], axis=0)                             # (TB, 128)

    # Bias-free pooling_bce linear; only lane group 0 of wbce is nonzero.
    o_ref[...] = jnp.dot(pooled, wbce_ref[...],
                         preferred_element_type=jnp.float32)


# ---------------------------------------------------------------------------
# Wrapper-side im2col with the 4 pooling quadrants packed along the lane axis.
#   (B, H, W, Cin) -> (B, q, 4*Kpad), q = (H//2)*(W//2)
# Lane group g holds the Kpad-padded im2col row of 2x2-window element g.
# ---------------------------------------------------------------------------
def _im2col_lane_quadrants(x_nhwc, kpad):
    B, H, W, Cin = x_nhwc.shape
    K = 9 * Cin
    q = (H // 2) * (W // 2)
    xp = jnp.pad(x_nhwc, ((0, 0), (1, 1), (1, 1), (0, 0)))
    cols = [xp[:, dy:dy + H, dx:dx + W, :] for dy in range(3) for dx in range(3)]
    pat = jnp.concatenate(cols, axis=-1)                  # (B, H, W, 9*Cin)
    pat = jnp.pad(pat, ((0, 0), (0, 0), (0, 0), (0, kpad - K)))
    quads = [pat[:, 0::2, 0::2, :], pat[:, 0::2, 1::2, :],
             pat[:, 1::2, 0::2, :], pat[:, 1::2, 1::2, :]]
    return jnp.concatenate([g.reshape(B, q, kpad) for g in quads], axis=-1)


def _pick_tb(batch, q):
    """Images per grid step: fit 2x patch tile in ~8 MiB, cap at 64, keep the
    sublane block dim either == batch or a multiple of 8."""
    row_bytes = 128 * 4
    cap = (8 << 20) // (2 * q * row_bytes)
    cap = max(8, min(64, (cap // 8) * 8))
    return batch if batch <= cap else cap


# ---------------------------------------------------------------------------
# Full forward (eval mode): returns (bce_out, loss) with loss == zeros(batch).
# ---------------------------------------------------------------------------
def res_selective_fc_forward(x_nchw, target, p, tb=None):
    del target  # only used in the (untranslated) training branch
    x = jnp.transpose(x_nchw, (0, 2, 3, 1)).astype(jnp.float32)   # NCHW -> NHWC
    B, H, W, Cin = x.shape
    assert H % 2 == 0 and W % 2 == 0, "2x2 maxpool floor-mode: use even H, W"
    C = p["conv1_w"].shape[-1]
    assert C == 32, "lane-group packing assumes out_feat_dim == 32"
    K = 9 * Cin
    Kpad = 32
    assert K <= Kpad, "lane-group packing assumes 9*Cin <= 32 (RGB-class input)"
    q = (H // 2) * (W // 2)
    assert q % 8 == 0

    if tb is None:
        tb = _pick_tb(B, q)
    Bp = -(-B // tb) * tb

    patches = _im2col_lane_quadrants(x, Kpad)                    # (B, q, 128)
    if Bp != B:
        patches = jnp.pad(patches, ((0, Bp - B), (0, 0), (0, 0)))
    patches = patches.reshape(Bp * q, 4 * Kpad)                  # (Bp*q, 128)

    eye4 = jnp.eye(4, dtype=jnp.float32)
    w1 = jnp.pad(p["conv1_w"].reshape(K, C), ((0, Kpad - K), (0, 0)))
    w1_bd = jnp.kron(eye4, w1)                                   # (128, 128)
    s1 = jnp.tile(p["bn1_scale"], (1, 4))                        # (1, 128)
    b1 = jnp.tile(p["bn1_shift"], (1, 4))
    wpw = jnp.stack([jnp.kron(eye4, p[f"layer{i}_w"]) for i in range(1, 5)])
    spw = jnp.stack([jnp.tile(p[f"layer{i}_scale"], (1, 4)) for i in range(1, 5)])
    bpw = jnp.stack([jnp.tile(p[f"layer{i}_shift"], (1, 4)) for i in range(1, 5)])

    NC = p["bce_w_t"].shape[1]
    NCpad = -(-NC // 128) * 128
    wbce = jnp.pad(p["bce_w_t"], ((0, 128 - C), (0, NCpad - NC)))  # (128, NCpad)

    grid = (Bp // tb,)
    kernel = functools.partial(fused_forward_kernel, tb=tb, q=q, c=C)

    flops = 2 * Bp * q * 128 * 128 * 5 + 2 * Bp * 128 * NCpad
    bytes_accessed = 4 * (patches.size + w1_bd.size + s1.size + b1.size
                          + wpw.size + spw.size + bpw.size + wbce.size
                          + Bp * NCpad)

    out = pl.pallas_call(
        kernel,
        out_shape=jax.ShapeDtypeStruct((Bp, NCpad), jnp.float32),
        grid=grid,
        in_specs=[
            pl.BlockSpec((tb * q, 4 * Kpad), lambda b: (b, 0)),
            pl.BlockSpec((128, 128), lambda b: (0, 0)),
            pl.BlockSpec((1, 128), lambda b: (0, 0)),
            pl.BlockSpec((1, 128), lambda b: (0, 0)),
            pl.BlockSpec((4, 128, 128), lambda b: (0, 0, 0)),
            pl.BlockSpec((4, 1, 128), lambda b: (0, 0, 0)),
            pl.BlockSpec((4, 1, 128), lambda b: (0, 0, 0)),
            pl.BlockSpec((128, NCpad), lambda b: (0, 0)),
        ],
        out_specs=pl.BlockSpec((tb, NCpad), lambda b: (b, 0)),
        compiler_params=pltpu.CompilerParams(
            dimension_semantics=("parallel",)),
        cost_estimate=pl.CostEstimate(
            flops=flops, transcendentals=0, bytes_accessed=bytes_accessed),
    )(patches, w1_bd, s1, b1, wpw, spw, bpw, wbce)

    bce_out = out[:B, :NC]
    loss = jnp.zeros((B,), jnp.float32)
    return bce_out, loss


# ---------------------------------------------------------------------------
# Deterministic parameter init + pure-JAX reference for verification.
# ---------------------------------------------------------------------------
def _bn_affine(key, c):
    k1, k2, k3, k4 = jax.random.split(key, 4)
    gamma = 1.0 + 0.1 * jax.random.normal(k1, (c,), jnp.float32)
    beta = 0.1 * jax.random.normal(k2, (c,), jnp.float32)
    mean = 0.1 * jax.random.normal(k3, (c,), jnp.float32)
    var = 0.5 + jax.random.uniform(k4, (c,), jnp.float32)
    scale = gamma / jnp.sqrt(var + 1e-5)
    shift = beta - mean * scale
    return scale.reshape(1, c), shift.reshape(1, c)


def init_params(key, cin=3, feat_dim=32, num_classes=20):
    keys = jax.random.split(key, 12)
    p = {}
    p["conv1_w"] = jax.random.normal(keys[0], (3, 3, cin, feat_dim),
                                     jnp.float32) * (1.0 / (3.0 * cin ** 0.5))
    p["bn1_scale"], p["bn1_shift"] = _bn_affine(keys[1], feat_dim)
    for i in range(1, 5):
        p[f"layer{i}_w"] = jax.random.normal(
            keys[1 + i], (feat_dim, feat_dim), jnp.float32) / (feat_dim ** 0.5)
        p[f"layer{i}_scale"], p[f"layer{i}_shift"] = _bn_affine(keys[6 + i], feat_dim)
    # nn.Linear(out_feat_dim, num_classes, bias=False): weight is (NC, C); use W^T.
    w_bce = jax.random.normal(keys[11], (num_classes, feat_dim),
                              jnp.float32) / (feat_dim ** 0.5)
    p["bce_w_t"] = w_bce.T
    return p


def reference_forward(x_nchw, p):
    hp = jax.lax.Precision.HIGHEST
    x = jnp.transpose(x_nchw, (0, 2, 3, 1)).astype(jnp.float32)
    y = jax.lax.conv_general_dilated(
        x, p["conv1_w"], (1, 1), "SAME",
        dimension_numbers=("NHWC", "HWIO", "NHWC"), precision=hp)
    y = jnp.maximum(y * p["bn1_scale"][0] + p["bn1_shift"][0], 0.0)
    B, H, W, C = y.shape
    y = y.reshape(B, H // 2, 2, W // 2, 2, C).max(axis=(2, 4))
    z = y.reshape(-1, C)
    for i in range(1, 5):
        h = jnp.maximum(jnp.dot(z, p[f"layer{i}_w"], precision=hp)
                        * p[f"layer{i}_scale"][0] + p[f"layer{i}_shift"][0], 0.0)
        z = h + z
    feat = z.reshape(B, (H // 2) * (W // 2), C)
    pooled = jnp.max(feat, axis=1)
    return jnp.dot(pooled, p["bce_w_t"], precision=hp)


if __name__ == "__main__":
    key = jax.random.PRNGKey(0)
    kx, kt, kp = jax.random.split(key, 3)
    B, Cin, H, W = 2, 3, 16, 16
    num_classes = 20
    x = jax.random.normal(kx, (B, Cin, H, W), jnp.float32)
    target = (jax.random.uniform(kt, (B, num_classes)) > 0.7).astype(jnp.float32)
    params = init_params(kp, cin=Cin, feat_dim=32, num_classes=num_classes)

    bce_out, loss = res_selective_fc_forward(x, target, params)
    jax.block_until_ready((bce_out, loss))

    ref = reference_forward(x, params)
    assert bce_out.shape == (B, num_classes) and loss.shape == (B,)
    err = float(jnp.max(jnp.abs(bce_out - ref)))
    assert jnp.allclose(bce_out, ref, atol=2e-3, rtol=2e-3), f"max|err|={err}"
    assert jnp.all(loss == 0.0)
    print("KERNEL_OK")
</pallas_src>

<mosaic_0001>
module attributes {stable_mosaic.version = 11 : i64} {
  func.func @fused_forward_kernel(%arg0: i32, %arg1: memref<128x128xf32, #tpu.memory_space<vmem>>, %arg2: memref<128x128xf32, #tpu.memory_space<vmem>>, %arg3: memref<1x128xf32, #tpu.memory_space<vmem>>, %arg4: memref<1x128xf32, #tpu.memory_space<vmem>>, %arg5: memref<4x128x128xf32, #tpu.memory_space<vmem>>, %arg6: memref<4x1x128xf32, #tpu.memory_space<vmem>>, %arg7: memref<4x1x128xf32, #tpu.memory_space<vmem>>, %arg8: memref<128x128xf32, #tpu.memory_space<vmem>>, %arg9: memref<2x128xf32, #tpu.memory_space<vmem>>) attributes {dimension_semantics = [#tpu.dimension_semantics<parallel>], iteration_bounds = array<i64: 1>, scalar_prefetch = 0 : i64, scratch_operands = 0 : i64, tpu.core_type = #tpu.core_type<tc>, window_params = [{transform_indices = @transform_0, window_bounds = array<i64: 128, 128>}, {pipeline_mode = #tpu.pipeline_mode<synchronous>, transform_indices = @transform_1, window_bounds = array<i64: 128, 128>}, {pipeline_mode = #tpu.pipeline_mode<synchronous>, transform_indices = @transform_2, window_bounds = array<i64: 1, 128>}, {pipeline_mode = #tpu.pipeline_mode<synchronous>, transform_indices = @transform_3, window_bounds = array<i64: 1, 128>}, {pipeline_mode = #tpu.pipeline_mode<synchronous>, transform_indices = @transform_4, window_bounds = array<i64: 4, 128, 128>}, {pipeline_mode = #tpu.pipeline_mode<synchronous>, transform_indices = @transform_5, window_bounds = array<i64: 4, 1, 128>}, {pipeline_mode = #tpu.pipeline_mode<synchronous>, transform_indices = @transform_6, window_bounds = array<i64: 4, 1, 128>}, {pipeline_mode = #tpu.pipeline_mode<synchronous>, transform_indices = @transform_7, window_bounds = array<i64: 128, 128>}, {transform_indices = @transform_8, window_bounds = array<i64: 2, 128>}]} {
    %c0 = arith.constant 0 : index
    %c0_0 = arith.constant 0 : index
    %0 = vector.load %arg1[%c0, %c0_0] : memref<128x128xf32, #tpu.memory_space<vmem>>, vector<128x128xf32>
    %c0_1 = arith.constant 0 : index
    %c0_2 = arith.constant 0 : index
    %1 = vector.load %arg2[%c0_1, %c0_2] : memref<128x128xf32, #tpu.memory_space<vmem>>, vector<128x128xf32>
    %cst = arith.constant dense<0.000000e+00> : vector<128x128xf32>
    %2 = tpu.matmul %0, %1, %cst {dimension_numbers = #tpu.dot_dimension_numbers<[1], [0], [0], [1], [0, 0, 1, 1], [], []>} : vector<128x128xf32>, vector<128x128xf32>, vector<128x128xf32> -> vector<128x128xf32>
    %c0_3 = arith.constant 0 : index
    %c0_4 = arith.constant 0 : index
    %3 = vector.load %arg3[%c0_3, %c0_4] : memref<1x128xf32, #tpu.memory_space<vmem>>, vector<1x128xf32>
    %4 = vector.broadcast %3 : vector<1x128xf32> to vector<128x128xf32>
    %5 = arith.mulf %2, %4 : vector<128x128xf32>
    %c0_5 = arith.constant 0 : index
    %c0_6 = arith.constant 0 : index
    %6 = vector.load %arg4[%c0_5, %c0_6] : memref<1x128xf32, #tpu.memory_space<vmem>>, vector<1x128xf32>
    %7 = vector.broadcast %6 : vector<1x128xf32> to vector<128x128xf32>
    %8 = arith.addf %5, %7 : vector<128x128xf32>
    %cst_7 = arith.constant 0.000000e+00 : f32
    %9 = vector.broadcast %cst_7 : f32 to vector<128x128xf32>
    %10 = arith.maximumf %8, %9 : vector<128x128xf32>
    %c32_i32 = arith.constant 32 : i32
    %11 = tpu.dynamic_rotate %10 by %c32_i32 dim 1 : vector<128x128xf32>, i32 -> vector<128x128xf32>
    %12 = arith.maximumf %10, %11 : vector<128x128xf32>
    %c64_i32 = arith.constant 64 : i32
    %13 = tpu.dynamic_rotate %10 by %c64_i32 dim 1 : vector<128x128xf32>, i32 -> vector<128x128xf32>
    %c96_i32 = arith.constant 96 : i32
    %14 = tpu.dynamic_rotate %10 by %c96_i32 dim 1 : vector<128x128xf32>, i32 -> vector<128x128xf32>
    %15 = arith.maximumf %13, %14 : vector<128x128xf32>
    %16 = arith.maximumf %12, %15 : vector<128x128xf32>
    %c0_8 = arith.constant 0 : index
    %c0_9 = arith.constant 0 : index
    %c0_10 = arith.constant 0 : index
    %17 = vector.load %arg5[%c0_8, %c0_9, %c0_10] : memref<4x128x128xf32, #tpu.memory_space<vmem>>, vector<1x128x128xf32>
    %18 = vector.shape_cast %17 : vector<1x128x128xf32> to vector<128x128xf32>
    %cst_11 = arith.constant dense<0.000000e+00> : vector<128x128xf32>
    %19 = tpu.matmul %16, %18, %cst_11 {dimension_numbers = #tpu.dot_dimension_numbers<[1], [0], [0], [1], [0, 0, 1, 1], [], []>} : vector<128x128xf32>, vector<128x128xf32>, vector<128x128xf32> -> vector<128x128xf32>
    %c0_12 = arith.constant 0 : index
    %c0_13 = arith.constant 0 : index
    %c0_14 = arith.constant 0 : index
    %20 = vector.load %arg6[%c0_12, %c0_13, %c0_14] : memref<4x1x128xf32, #tpu.memory_space<vmem>>, vector<1x1x128xf32>
    %21 = vector.shape_cast %20 : vector<1x1x128xf32> to vector<1x128xf32>
    %22 = vector.broadcast %21 : vector<1x128xf32> to vector<128x128xf32>
    %23 = arith.mulf %19, %22 : vector<128x128xf32>
    %c0_15 = arith.constant 0 : index
    %c0_16 = arith.constant 0 : index
    %c0_17 = arith.constant 0 : index
    %24 = vector.load %arg7[%c0_15, %c0_16, %c0_17] : memref<4x1x128xf32, #tpu.memory_space<vmem>>, vector<1x1x128xf32>
    %25 = vector.shape_cast %24 : vector<1x1x128xf32> to vector<1x128xf32>
    %26 = vector.broadcast %25 : vector<1x128xf32> to vector<128x128xf32>
    %27 = arith.addf %23, %26 : vector<128x128xf32>
    %cst_18 = arith.constant 0.000000e+00 : f32
    %28 = vector.broadcast %cst_18 : f32 to vector<128x128xf32>
    %29 = arith.maximumf %27, %28 : vector<128x128xf32>
    %30 = arith.addf %29, %16 : vector<128x128xf32>
    %c1 = arith.constant 1 : index
    %c0_19 = arith.constant 0 : index
    %c0_20 = arith.constant 0 : index
    %31 = vector.load %arg5[%c1, %c0_19, %c0_20] : memref<4x128x128xf32, #tpu.memory_space<vmem>>, vector<1x128x128xf32>
    %32 = vector.shape_cast %31 : vector<1x128x128xf32> to vector<128x128xf32>
    %cst_21 = arith.constant dense<0.000000e+00> : vector<128x128xf32>
    %33 = tpu.matmul %30, %32, %cst_21 {dimension_numbers = #tpu.dot_dimension_numbers<[1], [0], [0], [1], [0, 0, 1, 1], [], []>} : vector<128x128xf32>, vector<128x128xf32>, vector<128x128xf32> -> vector<128x128xf32>
    %c1_22 = arith.constant 1 : index
    %c0_23 = arith.constant 0 : index
    %c0_24 = arith.constant 0 : index
    %34 = vector.load %arg6[%c1_22, %c0_23, %c0_24] : memref<4x1x128xf32, #tpu.memory_space<vmem>>, vector<1x1x128xf32>
    %35 = vector.shape_cast %34 : vector<1x1x128xf32> to vector<1x128xf32>
    %36 = vector.broadcast %35 : vector<1x128xf32> to vector<128x128xf32>
    %37 = arith.mulf %33, %36 : vector<128x128xf32>
    %c1_25 = arith.constant 1 : index
    %c0_26 = arith.constant 0 : index
    %c0_27 = arith.constant 0 : index
    %38 = vector.load %arg7[%c1_25, %c0_26, %c0_27] : memref<4x1x128xf32, #tpu.memory_space<vmem>>, vector<1x1x128xf32>
    %39 = vector.shape_cast %38 : vector<1x1x128xf32> to vector<1x128xf32>
    %40 = vector.broadcast %39 : vector<1x128xf32> to vector<128x128xf32>
    %41 = arith.addf %37, %40 : vector<128x128xf32>
    %cst_28 = arith.constant 0.000000e+00 : f32
    %42 = vector.broadcast %cst_28 : f32 to vector<128x128xf32>
    %43 = arith.maximumf %41, %42 : vector<128x128xf32>
    %44 = arith.addf %43, %30 : vector<128x128xf32>
    %c2 = arith.constant 2 : index
    %c0_29 = arith.constant 0 : index
    %c0_30 = arith.constant 0 : index
    %45 = vector.load %arg5[%c2, %c0_29, %c0_30] : memref<4x128x128xf32, #tpu.memory_space<vmem>>, vector<1x128x128xf32>
    %46 = vector.shape_cast %45 : vector<1x128x128xf32> to vector<128x128xf32>
    %cst_31 = arith.constant dense<0.000000e+00> : vector<128x128xf32>
    %47 = tpu.matmul %44, %46, %cst_31 {dimension_numbers = #tpu.dot_dimension_numbers<[1], [0], [0], [1], [0, 0, 1, 1], [], []>} : vector<128x128xf32>, vector<128x128xf32>, vector<128x128xf32> -> vector<128x128xf32>
    %c2_32 = arith.constant 2 : index
    %c0_33 = arith.constant 0 : index
    %c0_34 = arith.constant 0 : index
    %48 = vector.load %arg6[%c2_32, %c0_33, %c0_34] : memref<4x1x128xf32, #tpu.memory_space<vmem>>, vector<1x1x128xf32>
    %49 = vector.shape_cast %48 : vector<1x1x128xf32> to vector<1x128xf32>
    %50 = vector.broadcast %49 : vector<1x128xf32> to vector<128x128xf32>
    %51 = arith.mulf %47, %50 : vector<128x128xf32>
    %c2_35 = arith.constant 2 : index
    %c0_36 = arith.constant 0 : index
    %c0_37 = arith.constant 0 : index
    %52 = vector.load %arg7[%c2_35, %c0_36, %c0_37] : memref<4x1x128xf32, #tpu.memory_space<vmem>>, vector<1x1x128xf32>
    %53 = vector.shape_cast %52 : vector<1x1x128xf32> to vector<1x128xf32>
    %54 = vector.broadcast %53 : vector<1x128xf32> to vector<128x128xf32>
    %55 = arith.addf %51, %54 : vector<128x128xf32>
    %cst_38 = arith.constant 0.000000e+00 : f32
    %56 = vector.broadcast %cst_38 : f32 to vector<128x128xf32>
    %57 = arith.maximumf %55, %56 : vector<128x128xf32>
    %58 = arith.addf %57, %44 : vector<128x128xf32>
    %c3 = arith.constant 3 : index
    %c0_39 = arith.constant 0 : index
    %c0_40 = arith.constant 0 : index
    %59 = vector.load %arg5[%c3, %c0_39, %c0_40] : memref<4x128x128xf32, #tpu.memory_space<vmem>>, vector<1x128x128xf32>
    %60 = vector.shape_cast %59 : vector<1x128x128xf32> to vector<128x128xf32>
    %cst_41 = arith.constant dense<0.000000e+00> : vector<128x128xf32>
    %61 = tpu.matmul %58, %60, %cst_41 {dimension_numbers = #tpu.dot_dimension_numbers<[1], [0], [0], [1], [0, 0, 1, 1], [], []>} : vector<128x128xf32>, vector<128x128xf32>, vector<128x128xf32> -> vector<128x128xf32>
    %c3_42 = arith.constant 3 : index
    %c0_43 = arith.constant 0 : index
    %c0_44 = arith.constant 0 : index
    %62 = vector.load %arg6[%c3_42, %c0_43, %c0_44] : memref<4x1x128xf32, #tpu.memory_space<vmem>>, vector<1x1x128xf32>
    %63 = vector.shape_cast %62 : vector<1x1x128xf32> to vector<1x128xf32>
    %64 = vector.broadcast %63 : vector<1x128xf32> to vector<128x128xf32>
    %65 = arith.mulf %61, %64 : vector<128x128xf32>
    %c3_45 = arith.constant 3 : index
    %c0_46 = arith.constant 0 : index
    %c0_47 = arith.constant 0 : index
    %66 = vector.load %arg7[%c3_45, %c0_46, %c0_47] : memref<4x1x128xf32, #tpu.memory_space<vmem>>, vector<1x1x128xf32>
    %67 = vector.shape_cast %66 : vector<1x1x128xf32> to vector<1x128xf32>
    %68 = vector.broadcast %67 : vector<1x128xf32> to vector<128x128xf32>
    %69 = arith.addf %65, %68 : vector<128x128xf32>
    %cst_48 = arith.constant 0.000000e+00 : f32
    %70 = vector.broadcast %cst_48 : f32 to vector<128x128xf32>
    %71 = arith.maximumf %69, %70 : vector<128x128xf32>
    %72 = arith.addf %71, %58 : vector<128x128xf32>
    %73 = vector.extract_strided_slice %72 {offsets = [0, 0], sizes = [64, 128], strides = [1, 1]} : vector<128x128xf32> to vector<64x128xf32>
    %cst_49 = arith.constant dense<0xFF800000> : vector<128xf32>
    %74 = vector.multi_reduction <maximumf>, %73, %cst_49 [0] : vector<64x128xf32> to vector<128xf32>
    %75 = vector.shape_cast %74 : vector<128xf32> to vector<1x128xf32>
    %76 = vector.extract_strided_slice %72 {offsets = [64, 0], sizes = [64, 128], strides = [1, 1]} : vector<128x128xf32> to vector<64x128xf32>
    %cst_50 = arith.constant dense<0xFF800000> : vector<128xf32>
    %77 = vector.multi_reduction <maximumf>, %76, %cst_50 [0] : vector<64x128xf32> to vector<128xf32>
    %78 = vector.shape_cast %77 : vector<128xf32> to vector<1x128xf32>
    %79 = tpu.concatenate %75, %78 in 0 : vector<1x128xf32>, vector<1x128xf32> -> vector<2x128xf32>
    %c0_51 = arith.constant 0 : index
    %c0_52 = arith.constant 0 : index
    %80 = vector.load %arg8[%c0_51, %c0_52] : memref<128x128xf32, #tpu.memory_space<vmem>>, vector<128x128xf32>
    %cst_53 = arith.constant dense<0.000000e+00> : vector<2x128xf32>
    %81 = tpu.matmul %79, %80, %cst_53 {dimension_numbers = #tpu.dot_dimension_numbers<[1], [0], [0], [1], [0, 0, 1, 1], [], []>} : vector<2x128xf32>, vector<128x128xf32>, vector<2x128xf32> -> vector<2x128xf32>
    %c0_54 = arith.constant 0 : index
    %c0_55 = arith.constant 0 : index
    %82 = vector.load %arg9[%c0_54, %c0_55] : memref<2x128xf32, #tpu.memory_space<vmem>>, vector<2x128xf32>
    tpu.vector_store %arg9[%c0_54, %c0_55], %81 {strides = array<i32>} : memref<2x128xf32, #tpu.memory_space<vmem>>, vector<2x128xf32>,
    return
  }
  func.func @transform_0(%arg0: i32) -> (i32, i32) {
    %c0_i32 = arith.constant 0 : i32
    %c0_i32_0 = arith.constant 0 : i32
    return %arg0, %c0_i32 : i32, i32
  }
  func.func @transform_1(%arg0: i32) -> (i32, i32) {
    %c0_i32 = arith.constant 0 : i32
    %c0_i32_0 = arith.constant 0 : i32
    %c0_i32_1 = arith.constant 0 : i32
    return %c0_i32, %c0_i32_0 : i32, i32
  }
  func.func @transform_2(%arg0: i32) -> (i32, i32) {
    %c0_i32 = arith.constant 0 : i32
    %c0_i32_0 = arith.constant 0 : i32
    %c0_i32_1 = arith.constant 0 : i32
    return %c0_i32, %c0_i32_0 : i32, i32
  }
  func.func @transform_3(%arg0: i32) -> (i32, i32) {
    %c0_i32 = arith.constant 0 : i32
    %c0_i32_0 = arith.constant 0 : i32
    %c0_i32_1 = arith.constant 0 : i32
    return %c0_i32, %c0_i32_0 : i32, i32
  }
  func.func @transform_4(%arg0: i32) -> (i32, i32, i32) {
    %c0_i32 = arith.constant 0 : i32
    %c0_i32_0 = arith.constant 0 : i32
    %c0_i32_1 = arith.constant 0 : i32
    %c0_i32_2 = arith.constant 0 : i32
    return %c0_i32, %c0_i32_0, %c0_i32_1 : i32, i32, i32
  }
  func.func @transform_5(%arg0: i32) -> (i32, i32, i32) {
    %c0_i32 = arith.constant 0 : i32
    %c0_i32_0 = arith.constant 0 : i32
    %c0_i32_1 = arith.constant 0 : i32
    %c0_i32_2 = arith.constant 0 : i32
    return %c0_i32, %c0_i32_0, %c0_i32_1 : i32, i32, i32
  }
  func.func @transform_6(%arg0: i32) -> (i32, i32, i32) {
    %c0_i32 = arith.constant 0 : i32
    %c0_i32_0 = arith.constant 0 : i32
    %c0_i32_1 = arith.constant 0 : i32
    %c0_i32_2 = arith.constant 0 : i32
    return %c0_i32, %c0_i32_0, %c0_i32_1 : i32, i32, i32
  }
  func.func @transform_7(%arg0: i32) -> (i32, i32) {
    %c0_i32 = arith.constant 0 : i32
    %c0_i32_0 = arith.constant 0 : i32
    %c0_i32_1 = arith.constant 0 : i32
    return %c0_i32, %c0_i32_0 : i32, i32
  }
  func.func @transform_8(%arg0: i32) -> (i32, i32) {
    %c0_i32 = arith.constant 0 : i32
    %c0_i32_0 = arith.constant 0 : i32
    return %arg0, %c0_i32 : i32, i32
  }
}

</mosaic_0001>

<llo_original>
// kernel: tpu_custom_call.1
$region0: #{tpu_custom_call.1}
  #allocation0 [shape = 'u32[]', space=smem, size = 0x4, offset = 0x4, fixed_abs, tag = 'smem constant byte address 0x4 - core index']
  #allocation1 [shape = 'u32[72,128]{1,0:T(1,128)}', space=vmem, size = 0x9000, scoped, tag = 'internal scratch']
  %s0 = inlined_call_operand.hbm [shape: f32[128,128], index: 0, kind: input, shape index: {}]
  %s1 = inlined_call_operand.hbm [shape: f32[128,128], index: 1, kind: input, shape index: {}]
  %s2 = inlined_call_operand.hbm [shape: f32[1,128], index: 2, kind: input, shape index: {}]
  %s3 = inlined_call_operand.hbm [shape: f32[1,128], index: 3, kind: input, shape index: {}]
  %s4 = inlined_call_operand.hbm [shape: f32[4,128,128], index: 4, kind: input, shape index: {}]
  %s5 = inlined_call_operand.vmem [shape: f32[4,1,128], index: 5, kind: input, shape index: {}]
  %s6 = inlined_call_operand.hbm [shape: f32[4,1,128], index: 6, kind: input, shape index: {}]
  %s7 = inlined_call_operand.hbm [shape: f32[128,128], index: 7, kind: input, shape index: {}]
  %s8 = inlined_call_operand.hbm [shape: f32[2,128], index: 8, kind: output, shape index: {}]
  %s9 = sld [smem:[#allocation0]]
  $region70: #{tpu_custom_call.1} parent=0
    _
  %s11 = ssub.s32 1, %s9
  %s12 = scalar_select 0, %s11, %s9
  $region1: #{tpu_custom_call.1} parent=0
    #allocation2 [shape = 'u8[65536]{0}', space=vmem, size = 0x10000, scoped, tag = 'input window, operand 0, single buffered']
    #allocation3 [shape = 's32[1]{0}', space=sflag, size = 0x4, scoped, tag = 'scoped memory for tpu_custom_call.1']
    #allocation4 [shape = 's32[1]{0}', space=sflag, size = 0x4, scoped, tag = 'scoped memory for tpu_custom_call.1']
    #allocation5 [shape = 'u8[65536]{0}', space=vmem, size = 0x10000, scoped, tag = 'input window, operand 1, single buffered']
    #allocation6 [shape = 's32[1]{0}', space=sflag, size = 0x4, scoped, tag = 'scoped memory for tpu_custom_call.1']
    #allocation7 [shape = 'u8[512]{0}', space=vmem, size = 0x400, scoped, tag = 'input window, operand 2, single buffered']
    #allocation8 [shape = 'u8[512]{0}', space=vmem, size = 0x400, scoped, tag = 'input window, operand 3, single buffered']
    #allocation9 [shape = 's32[1]{0}', space=sflag, size = 0x4, scoped, tag = 'scoped memory for tpu_custom_call.1']
    #allocation10 [shape = 'u8[262144]{0}', space=vmem, size = 0x40000, scoped, tag = 'input window, operand 4, single buffered']
    #allocation11 [shape = 'u8[2048]{0}', space=vmem, size = 0x800, scoped, tag = 'input window, operand 6, single buffered']
    #allocation12 [shape = 's32[1]{0}', space=sflag, size = 0x4, scoped, tag = 'scoped memory for tpu_custom_call.1']
    #allocation13 [shape = 'u8[65536]{0}', space=vmem, size = 0x10000, scoped, tag = 'input window, operand 7, single buffered']
    #allocation14 [shape = 'u8[1024]{0}', space=vmem, size = 0x400, scoped, tag = 'output window, operand 0, single buffered']
    %13 = vsyncpa [#allocation3], 0
    %14 = vsyncpa [#allocation6], 0
    %15 = vsyncpa [#allocation9], 0
    %16 = vsyncpa [#allocation12], 0
    %17 = vsyncpa [#allocation4], 0
    // Predicated region
    $region2: #{tpu_custom_call.1} parent=1 // pred_check
      _
    $region3: #{tpu_custom_call.1} parent=1 // pred_check_branch
      %19 = sbr.rel (0) target = $region5
    $region4: #{tpu_custom_call.1} parent=1 // pred_region
      %21 = vsyncadd [#allocation3], 0
      %s22 = sshll.u32 %s0, 4
      %s23 = int_to_ptr.hbm [resolvable:$true] %s22
      %s24 = sshll.u32 [#allocation2], 4
      %s25 = int_to_ptr.vmem [resolvable:$true] %s24
      %30 = dma.hbm_to_vmem [thread:$0]  %s23, 2048, %s25, [#allocation3], 128, 128, 8
    $region5: #{tpu_custom_call.1} parent=1 // pred_fallthru
      _
    // Predicated region
    $region6: #{tpu_custom_call.1} parent=1 // pred_check
      _
    $region7: #{tpu_custom_call.1} parent=1 // pred_check_branch
      %32 = sbr.rel (0) target = $region9
    $region8: #{tpu_custom_call.1} parent=1 // pred_region
      %34 = vsyncadd [#allocation6], 0
      %s35 = sshll.u32 %s1, 4
      %s36 = int_to_ptr.hbm [resolvable:$true] %s35
      %s37 = sshll.u32 [#allocation5], 4
      %s38 = int_to_ptr.vmem [resolvable:$true] %s37
      %43 = dma.hbm_to_vmem [thread:$0]  %s36, 2048, %s38, [#allocation6], 128, 128, 8
    $region9: #{tpu_custom_call.1} parent=1 // pred_fallthru
      _
    // Predicated region
    $region10: #{tpu_custom_call.1} parent=1 // pred_check
      _
    $region11: #{tpu_custom_call.1} parent=1 // pred_check_branch
      %45 = sbr.rel (0) target = $region13
    $region12: #{tpu_custom_call.1} parent=1 // pred_region
      %47 = vsyncadd [#allocation6], 0
      %s49 = sshll.u32 %s2, 4
      %s50 = int_to_ptr.hbm [resolvable:$true] %s49
      %s51 = sshll.u32 [#allocation7], 4
      %s52 = int_to_ptr.vmem [resolvable:$true] %s51
      %54 = dma.hbm_to_vmem [thread:$0]  %s50, 16, %s52, [#allocation6]
    $region13: #{tpu_custom_call.1} parent=1 // pred_fallthru
      _
    // Predicated region
    $region14: #{tpu_custom_call.1} parent=1 // pred_check
      _
    $region15: #{tpu_custom_call.1} parent=1 // pred_check_branch
      %56 = sbr.rel (0) target = $region17
    $region16: #{tpu_custom_call.1} parent=1 // pred_region
      %58 = vsyncadd [#allocation9], 0
      %s60 = sshll.u32 %s3, 4
      %s61 = int_to_ptr.hbm [resolvable:$true] %s60
      %s62 = sshll.u32 [#allocation8], 4
      %s63 = int_to_ptr.vmem [resolvable:$true] %s62
      %65 = dma.hbm_to_vmem [thread:$0]  %s61, 16, %s63, [#allocation9]
    $region17: #{tpu_custom_call.1} parent=1 // pred_fallthru
      _
    // Predicated region
    $region18: #{tpu_custom_call.1} parent=1 // pred_check
      _
    $region19: #{tpu_custom_call.1} parent=1 // pred_check_branch
      %67 = sbr.rel (0) target = $region21
    $region20: #{tpu_custom_call.1} parent=1 // pred_region
      %69 = vsyncadd [#allocation9], 0
      %s70 = sshll.u32 %s4, 4
      %s71 = int_to_ptr.hbm [resolvable:$true] %s70
      %s72 = sshll.u32 [#allocation10], 4
      %s73 = int_to_ptr.vmem [resolvable:$true] %s72
      %78 = dma.hbm_to_vmem [thread:$0]  %s71, 8192, %s73, [#allocation9], 128, 128, 8
    $region21: #{tpu_custom_call.1} parent=1 // pred_fallthru
      _
    // Predicated region
    $region22: #{tpu_custom_call.1} parent=1 // pred_check
      _
    $region23: #{tpu_custom_call.1} parent=1 // pred_check_branch
      %80 = sbr.rel (0) target = $region25
    $region24: #{tpu_custom_call.1} parent=1 // pred_region
      _
    $region25: #{tpu_custom_call.1} parent=1 // pred_fallthru
      _
    // Predicated region
    $region26: #{tpu_custom_call.1} parent=1 // pred_check
      _
    $region27: #{tpu_custom_call.1} parent=1 // pred_check_branch
      %82 = sbr.rel (0) target = $region29
    $region28: #{tpu_custom_call.1} parent=1 // pred_region
      %84 = vsyncadd [#allocation12], 0
      %s85 = sshll.u32 %s6, 4
      %s86 = int_to_ptr.hbm [resolvable:$true] %s85
      %s87 = sshll.u32 [#allocation11], 4
      %s88 = int_to_ptr.vmem [resolvable:$true] %s87
      %93 = dma.hbm_to_vmem [thread:$0]  %s86, 64, %s88, [#allocation12], 16, 16, 1
    $region29: #{tpu_custom_call.1} parent=1 // pred_fallthru
      _
    // Predicated region
    $region30: #{tpu_custom_call.1} parent=1 // pred_check
      _
    $region31: #{tpu_custom_call.1} parent=1 // pred_check_branch
      %95 = sbr.rel (0) target = $region33
    $region32: #{tpu_custom_call.1} parent=1 // pred_region
      %97 = vsyncadd [#allocation12], 0
      %s98 = sshll.u32 %s7, 4
      %s99 = int_to_ptr.hbm [resolvable:$true] %s98
      %s100 = sshll.u32 [#allocation13], 4
      %s101 = int_to_ptr.vmem [resolvable:$true] %s100
      %106 = dma.hbm_to_vmem [thread:$0]  %s99, 2048, %s101, [#allocation12], 128, 128, 8
    $region33: #{tpu_custom_call.1} parent=1 // pred_fallthru
      _
    // Predicated region
    $region34: #{tpu_custom_call.1} parent=1 // pred_check
      _
    $region35: #{tpu_custom_call.1} parent=1 // pred_check_branch
      %108 = sbr.rel (0) target = $region37
    $region36: #{tpu_custom_call.1} parent=1 // pred_region
      %110 = dma.done [#allocation3], 2048
    $region37: #{tpu_custom_call.1} parent=1 // pred_fallthru
      _
    // Predicated region
    $region38: #{tpu_custom_call.1} parent=1 // pred_check
      _
    $region39: #{tpu_custom_call.1} parent=1 // pred_check_branch
      %112 = sbr.rel (0) target = $region41
    $region40: #{tpu_custom_call.1} parent=1 // pred_region
      %114 = dma.done [#allocation6], 2048
    $region41: #{tpu_custom_call.1} parent=1 // pred_fallthru
      _
    // Predicated region
    $region42: #{tpu_custom_call.1} parent=1 // pred_check
      _
    $region43: #{tpu_custom_call.1} parent=1 // pred_check_branch
      %116 = sbr.rel (0) target = $region45
    $region44: #{tpu_custom_call.1} parent=1 // pred_region
      %118 = dma.done [#allocation6], 16
    $region45: #{tpu_custom_call.1} parent=1 // pred_fallthru
      _
    // Predicated region
    $region46: #{tpu_custom_call.1} parent=1 // pred_check
      _
    $region47: #{tpu_custom_call.1} parent=1 // pred_check_branch
      %120 = sbr.rel (0) target = $region49
    $region48: #{tpu_custom_call.1} parent=1 // pred_region
      %122 = dma.done [#allocation9], 16
    $region49: #{tpu_custom_call.1} parent=1 // pred_fallthru
      _
    // Predicated region
    $region50: #{tpu_custom_call.1} parent=1 // pred_check
      _
    $region51: #{tpu_custom_call.1} parent=1 // pred_check_branch
      %124 = sbr.rel (0) target = $region53
    $region52: #{tpu_custom_call.1} parent=1 // pred_region
      %126 = dma.done [#allocation9], 8192
    $region53: #{tpu_custom_call.1} parent=1 // pred_fallthru
      _
    // Predicated region
    $region54: #{tpu_custom_call.1} parent=1 // pred_check
      _
    $region55: #{tpu_custom_call.1} parent=1 // pred_check_branch
      %128 = sbr.rel (0) target = $region57
    $region56: #{tpu_custom_call.1} parent=1 // pred_region
      %130 = dma.done [#allocation12], 64
    $region57: #{tpu_custom_call.1} parent=1 // pred_fallthru
      _
    // Predicated region
    $region58: #{tpu_custom_call.1} parent=1 // pred_check
      _
    $region59: #{tpu_custom_call.1} parent=1 // pred_check_branch
      %132 = sbr.rel (0) target = $region61
    $region60: #{tpu_custom_call.1} parent=1 // pred_region
      %134 = dma.done [#allocation12], 2048
    $region61: #{tpu_custom_call.1} parent=1 // pred_fallthru
      _
    %v135 = vld [vmem:[#allocation2] sm:$0xff]
    %v136 = vld [vmem:[#allocation2 + $0x8] sm:$0xff]
    %v137 = vld [vmem:[#allocation2 + $0x10] sm:$0xff]
    %v138 = vld [vmem:[#allocation2 + $0x18] sm:$0xff]
    %v139 = vld [vmem:[#allocation2 + $0x20] sm:$0xff]
    %v140 = vld [vmem:[#allocation2 + $0x28] sm:$0xff]
    %v141 = vld [vmem:[#allocation2 + $0x30] sm:$0xff]
    %v142 = vld [vmem:[#allocation2 + $0x38] sm:$0xff]
    %v143 = vld [vmem:[#allocation2 + $0x40] sm:$0xff]
    %v144 = vld [vmem:[#allocation2 + $0x48] sm:$0xff]
    %v145 = vld [vmem:[#allocation2 + $0x50] sm:$0xff]
    %v146 = vld [vmem:[#allocation2 + $0x58] sm:$0xff]
    %v147 = vld [vmem:[#allocation2 + $0x60] sm:$0xff]
    %v148 = vld [vmem:[#allocation2 + $0x68] sm:$0xff]
    %v149 = vld [vmem:[#allocation2 + $0x70] sm:$0xff]
    %v150 = vld [vmem:[#allocation2 + $0x78] sm:$0xff]
    %v151 = vld [vmem:[#allocation5] sm:$0xff]
    %v152 = vld [vmem:[#allocation5 + $0x8] sm:$0xff]
    %v153 = vld [vmem:[#allocation5 + $0x10] sm:$0xff]
    %v154 = vld [vmem:[#allocation5 + $0x18] sm:$0xff]
    %v155 = vld [vmem:[#allocation5 + $0x20] sm:$0xff]
    %v156 = vld [vmem:[#allocation5 + $0x28] sm:$0xff]
    %v157 = vld [vmem:[#allocation5 + $0x30] sm:$0xff]
    %v158 = vld [vmem:[#allocation5 + $0x38] sm:$0xff]
    %v159 = vld [vmem:[#allocation5 + $0x40] sm:$0xff]
    %v160 = vld [vmem:[#allocation5 + $0x48] sm:$0xff]
    %v161 = vld [vmem:[#allocation5 + $0x50] sm:$0xff]
    %v162 = vld [vmem:[#allocation5 + $0x58] sm:$0xff]
    %v163 = vld [vmem:[#allocation5 + $0x60] sm:$0xff]
    %v164 = vld [vmem:[#allocation5 + $0x68] sm:$0xff]
    %v165 = vld [vmem:[#allocation5 + $0x70] sm:$0xff]
    %v166 = vld [vmem:[#allocation5 + $0x78] sm:$0xff]
    %167 = vmatpush.msra.mxu0 %v166
    %168 = vmatpush.msra.mxu0 %v165
    %169 = vmatpush.msra.mxu0 %v164
    %170 = vmatpush.msra.mxu0 %v163
    %171 = vmatpush.msra.mxu0 %v162
    %172 = vmatpush.msra.mxu0 %v161
    %173 = vmatpush.msra.mxu0 %v160
    %174 = vmatpush.msra.mxu0 %v159
    %175 = vmatpush.msra.mxu0 %v158
    %176 = vmatpush.msra.mxu0 %v157
    %177 = vmatpush.msra.mxu0 %v156
    %178 = vmatpush.msra.mxu0 %v155
    %179 = vmatpush.msra.mxu0 %v154
    %180 = vmatpush.msra.mxu0 %v153
    %181 = vmatpush.msra.mxu0 %v152
    %182 = vmatpush.msra.mxu0 %v151
    %183 = vmatmul.f32.gmra.mxu0 %v135
    %v184 = vpop.f32.mrf.mxu0
    %v185 = vadd.f32 0.0, %v184
    %186 = vmatmul.f32.gmra.mxu0 %v136
    %v187 = vpop.f32.mrf.mxu0
    %v188 = vadd.f32 0.0, %v187
    %189 = vmatmul.f32.gmra.mxu0 %v137
    %v190 = vpop.f32.mrf.mxu0
    %v191 = vadd.f32 0.0, %v190
    %192 = vmatmul.f32.gmra.mxu0 %v138
    %v193 = vpop.f32.mrf.mxu0
    %v194 = vadd.f32 0.0, %v193
    %195 = vmatmul.f32.gmra.mxu0 %v139
    %v196 = vpop.f32.mrf.mxu0
    %v197 = vadd.f32 0.0, %v196
    %198 = vmatmul.f32.gmra.mxu0 %v140
    %v199 = vpop.f32.mrf.mxu0
    %v200 = vadd.f32 0.0, %v199
    %201 = vmatmul.f32.gmra.mxu0 %v141
    %v202 = vpop.f32.mrf.mxu0
    %v203 = vadd.f32 0.0, %v202
    %204 = vmatmul.f32.gmra.mxu0 %v142
    %v205 = vpop.f32.mrf.mxu0
    %v206 = vadd.f32 0.0, %v205
    %207 = vmatmul.f32.gmra.mxu0 %v143
    %v208 = vpop.f32.mrf.mxu0
    %v209 = vadd.f32 0.0, %v208
    %210 = vmatmul.f32.gmra.mxu0 %v144
    %v211 = vpop.f32.mrf.mxu0
    %v212 = vadd.f32 0.0, %v211
    %213 = vmatmul.f32.gmra.mxu0 %v145
    %v214 = vpop.f32.mrf.mxu0
    %v215 = vadd.f32 0.0, %v214
    %216 = vmatmul.f32.gmra.mxu0 %v146
    %v217 = vpop.f32.mrf.mxu0
    %v218 = vadd.f32 0.0, %v217
    %219 = vmatmul.f32.gmra.mxu0 %v147
    %v220 = vpop.f32.mrf.mxu0
    %v221 = vadd.f32 0.0, %v220
    %222 = vmatmul.f32.gmra.mxu0 %v148
    %v223 = vpop.f32.mrf.mxu0
    %v224 = vadd.f32 0.0, %v223
    %225 = vmatmul.f32.gmra.mxu0 %v149
    %v226 = vpop.f32.mrf.mxu0
    %v227 = vadd.f32 0.0, %v226
    %228 = vmatmul.f32.gmra.mxu0 %v150
    %v229 = vpop.f32.mrf.mxu0
    %v230 = vadd.f32 0.0, %v229
    %231 = vdwg.mxu0
    %v232 = vld [vmem:[#allocation7] sm:$0x1]
    %v234 = vperm.slane %v232, 0
    %v236 = vmul.f32 %v185, %v234
    %v237 = vmul.f32 %v188, %v234
    %v238 = vmul.f32 %v191, %v234
    %v239 = vmul.f32 %v194, %v234
    %v240 = vmul.f32 %v197, %v234
    %v241 = vmul.f32 %v200, %v234
    %v242 = vmul.f32 %v203, %v234
    %v243 = vmul.f32 %v206, %v234
    %v244 = vmul.f32 %v209, %v234
    %v245 = vmul.f32 %v212, %v234
    %v246 = vmul.f32 %v215, %v234
    %v247 = vmul.f32 %v218, %v234
    %v248 = vmul.f32 %v221, %v234
    %v249 = vmul.f32 %v224, %v234
    %v250 = vmul.f32 %v227, %v234
    %v251 = vmul.f32 %v230, %v234
    %v252 = vld [vmem:[#allocation8] sm:$0x1]
    %v254 = vperm.slane %v252, 0
    %v256 = vadd.f32 %v236, %v254
    %v257 = vadd.f32 %v237, %v254
    %v258 = vadd.f32 %v238, %v254
    %v259 = vadd.f32 %v239, %v254
    %v260 = vadd.f32 %v240, %v254
    %v261 = vadd.f32 %v241, %v254
    %v262 = vadd.f32 %v242, %v254
    %v263 = vadd.f32 %v243, %v254
    %v264 = vadd.f32 %v244, %v254
    %v265 = vadd.f32 %v245, %v254
    %v266 = vadd.f32 %v246, %v254
    %v267 = vadd.f32 %v247, %v254
    %v268 = vadd.f32 %v248, %v254
    %v269 = vadd.f32 %v249, %v254
    %v270 = vadd.f32 %v250, %v254
    %v271 = vadd.f32 %v251, %v254
    %v272 = vmax.f32 %v256, 0.0
    %v273 = vmax.f32 %v257, 0.0
    %v274 = vmax.f32 %v258, 0.0
    %v275 = vmax.f32 %v259, 0.0
    %v276 = vmax.f32 %v260, 0.0
    %v277 = vmax.f32 %v261, 0.0
    %v278 = vmax.f32 %v262, 0.0
    %v279 = vmax.f32 %v263, 0.0
    %v280 = vmax.f32 %v264, 0.0
    %v281 = vmax.f32 %v265, 0.0
    %v282 = vmax.f32 %v266, 0.0
    %v283 = vmax.f32 %v267, 0.0
    %v284 = vmax.f32 %v268, 0.0
    %v285 = vmax.f32 %v269, 0.0
    %v286 = vmax.f32 %v270, 0.0
    %v287 = vmax.f32 %v271, 0.0
    %288 = vrot.lane.b32.xlu0 %v272, 32
    %v289 = vpop.permute.xlu0 %288
    %290 = vrot.lane.b32.xlu0 %v273, 32
    %v291 = vpop.permute.xlu0 %290
    %292 = vrot.lane.b32.xlu0 %v274, 32
    %v293 = vpop.permute.xlu0 %292
    %294 = vrot.lane.b32.xlu0 %v275, 32
    %v295 = vpop.permute.xlu0 %294
    %296 = vrot.lane.b32.xlu0 %v276, 32
    %v297 = vpop.permute.xlu0 %296
    %298 = vrot.lane.b32.xlu0 %v277, 32
    %v299 = vpop.permute.xlu0 %298
    %300 = vrot.lane.b32.xlu0 %v278, 32
    %v301 = vpop.permute.xlu0 %300
    %302 = vrot.lane.b32.xlu0 %v279, 32
    %v303 = vpop.permute.xlu0 %302
    %304 = vrot.lane.b32.xlu0 %v280, 32
    %v305 = vpop.permute.xlu0 %304
    %306 = vrot.lane.b32.xlu0 %v281, 32
    %v307 = vpop.permute.xlu0 %306
    %308 = vrot.lane.b32.xlu0 %v282, 32
    %v309 = vpop.permute.xlu0 %308
    %310 = vrot.lane.b32.xlu0 %v283, 32
    %v311 = vpop.permute.xlu0 %310
    %312 = vrot.lane.b32.xlu0 %v284, 32
    %v313 = vpop.permute.xlu0 %312
    %314 = vrot.lane.b32.xlu0 %v285, 32
    %v315 = vpop.permute.xlu0 %314
    %316 = vrot.lane.b32.xlu0 %v286, 32
    %v317 = vpop.permute.xlu0 %316
    %318 = vrot.lane.b32.xlu0 %v287, 32
    %v319 = vpop.permute.xlu0 %318
    %v320 = vmax.f32 %v272, %v289
    %v321 = vmax.f32 %v273, %v291
    %v322 = vmax.f32 %v274, %v293
    %v323 = vmax.f32 %v275, %v295
    %v324 = vmax.f32 %v276, %v297
    %v325 = vmax.f32 %v277, %v299
    %v326 = vmax.f32 %v278, %v301
    %v327 = vmax.f32 %v279, %v303
    %v328 = vmax.f32 %v280, %v305
    %v329 = vmax.f32 %v281, %v307
    %v330 = vmax.f32 %v282, %v309
    %v331 = vmax.f32 %v283, %v311
    %v332 = vmax.f32 %v284, %v313
    %v333 = vmax.f32 %v285, %v315
    %v334 = vmax.f32 %v286, %v317
    %v335 = vmax.f32 %v287, %v319
    %336 = vrot.lane.b32.xlu0 %v272, 64
    %v337 = vpop.permute.xlu0 %336
    %338 = vrot.lane.b32.xlu0 %v273, 64
    %v339 = vpop.permute.xlu0 %338
    %340 = vrot.lane.b32.xlu0 %v274, 64
    %v341 = vpop.permute.xlu0 %340
    %342 = vrot.lane.b32.xlu0 %v275, 64
    %v343 = vpop.permute.xlu0 %342
    %344 = vrot.lane.b32.xlu0 %v276, 64
    %v345 = vpop.permute.xlu0 %344
    %346 = vrot.lane.b32.xlu0 %v277, 64
    %v347 = vpop.permute.xlu0 %346
    %348 = vrot.lane.b32.xlu0 %v278, 64
    %v349 = vpop.permute.xlu0 %348
    %350 = vrot.lane.b32.xlu0 %v279, 64
    %v351 = vpop.permute.xlu0 %350
    %352 = vrot.lane.b32.xlu0 %v280, 64
    %v353 = vpop.permute.xlu0 %352
    %354 = vrot.lane.b32.xlu0 %v281, 64
    %v355 = vpop.permute.xlu0 %354
    %356 = vrot.lane.b32.xlu0 %v282, 64
    %v357 = vpop.permute.xlu0 %356
    %358 = vrot.lane.b32.xlu0 %v283, 64
    %v359 = vpop.permute.xlu0 %358
    %360 = vrot.lane.b32.xlu0 %v284, 64
    %v361 = vpop.permute.xlu0 %360
    %362 = vrot.lane.b32.xlu0 %v285, 64
    %v363 = vpop.permute.xlu0 %362
    %364 = vrot.lane.b32.xlu0 %v286, 64
    %v365 = vpop.permute.xlu0 %364
    %366 = vrot.lane.b32.xlu0 %v287, 64
    %v367 = vpop.permute.xlu0 %366
    %368 = vrot.lane.b32.xlu0 %v272, 96
    %v369 = vpop.permute.xlu0 %368
    %370 = vrot.lane.b32.xlu0 %v273, 96
    %v371 = vpop.permute.xlu0 %370
    %372 = vrot.lane.b32.xlu0 %v274, 96
    %v373 = vpop.permute.xlu0 %372
    %374 = vrot.lane.b32.xlu0 %v275, 96
    %v375 = vpop.permute.xlu0 %374
    %376 = vrot.lane.b32.xlu0 %v276, 96
    %v377 = vpop.permute.xlu0 %376
    %378 = vrot.lane.b32.xlu0 %v277, 96
    %v379 = vpop.permute.xlu0 %378
    %380 = vrot.lane.b32.xlu0 %v278, 96
    %v381 = vpop.permute.xlu0 %380
    %382 = vrot.lane.b32.xlu0 %v279, 96
    %v383 = vpop.permute.xlu0 %382
    %384 = vrot.lane.b32.xlu0 %v280, 96
    %v385 = vpop.permute.xlu0 %384
    %386 = vrot.lane.b32.xlu0 %v281, 96
    %v387 = vpop.permute.xlu0 %386
    %388 = vrot.lane.b32.xlu0 %v282, 96
    %v389 = vpop.permute.xlu0 %388
    %390 = vrot.lane.b32.xlu0 %v283, 96
    %v391 = vpop.permute.xlu0 %390
    %392 = vrot.lane.b32.xlu0 %v284, 96
    %v393 = vpop.permute.xlu0 %392
    %394 = vrot.lane.b32.xlu0 %v285, 96
    %v395 = vpop.permute.xlu0 %394
    %396 = vrot.lane.b32.xlu0 %v286, 96
    %v397 = vpop.permute.xlu0 %396
    %398 = vrot.lane.b32.xlu0 %v287, 96
    %v399 = vpop.permute.xlu0 %398
    %v400 = vmax.f32 %v337, %v369
    %v401 = vmax.f32 %v339, %v371
    %v402 = vmax.f32 %v341, %v373
    %v403 = vmax.f32 %v343, %v375
    %v404 = vmax.f32 %v345, %v377
    %v405 = vmax.f32 %v347, %v379
    %v406 = vmax.f32 %v349, %v381
    %v407 = vmax.f32 %v351, %v383
    %v408 = vmax.f32 %v353, %v385
    %v409 = vmax.f32 %v355, %v387
    %v410 = vmax.f32 %v357, %v389
    %v411 = vmax.f32 %v359, %v391
    %v412 = vmax.f32 %v361, %v393
    %v413 = vmax.f32 %v363, %v395
    %v414 = vmax.f32 %v365, %v397
    %v415 = vmax.f32 %v367, %v399
    %v416 = vmax.f32 %v320, %v400
    %v417 = vmax.f32 %v321, %v401
    %v418 = vmax.f32 %v322, %v402
    %v419 = vmax.f32 %v323, %v403
    %v420 = vmax.f32 %v324, %v404
    %v421 = vmax.f32 %v325, %v405
    %v422 = vmax.f32 %v326, %v406
    %v423 = vmax.f32 %v327, %v407
    %v424 = vmax.f32 %v328, %v408
    %v425 = vmax.f32 %v329, %v409
    %v426 = vmax.f32 %v330, %v410
    %v427 = vmax.f32 %v331, %v411
    %v428 = vmax.f32 %v332, %v412
    %v429 = vmax.f32 %v333, %v413
    %v430 = vmax.f32 %v334, %v414
    %v431 = vmax.f32 %v335, %v415
    %v432 = vld [vmem:[#allocation10] sm:$0xff]
    %v433 = vld [vmem:[#allocation10 + $0x8] sm:$0xff]
    %v434 = vld [vmem:[#allocation10 + $0x10] sm:$0xff]
    %v435 = vld [vmem:[#allocation10 + $0x18] sm:$0xff]
    %v436 = vld [vmem:[#allocation10 + $0x20] sm:$0xff]
    %v437 = vld [vmem:[#allocation10 + $0x28] sm:$0xff]
    %v438 = vld [vmem:[#allocation10 + $0x30] sm:$0xff]
    %v439 = vld [vmem:[#allocation10 + $0x38] sm:$0xff]
    %v440 = vld [vmem:[#allocation10 + $0x40] sm:$0xff]
    %v441 = vld [vmem:[#allocation10 + $0x48] sm:$0xff]
    %v442 = vld [vmem:[#allocation10 + $0x50] sm:$0xff]
    %v443 = vld [vmem:[#allocation10 + $0x58] sm:$0xff]
    %v444 = vld [vmem:[#allocation10 + $0x60] sm:$0xff]
    %v445 = vld [vmem:[#allocation10 + $0x68] sm:$0xff]
    %v446 = vld [vmem:[#allocation10 + $0x70] sm:$0xff]
    %v447 = vld [vmem:[#allocation10 + $0x78] sm:$0xff]
    %448 = vmatpush.msra.mxu0 %v447
    %449 = vmatpush.msra.mxu0 %v446
    %450 = vmatpush.msra.mxu0 %v445
    %451 = vmatpush.msra.mxu0 %v444
    %452 = vmatpush.msra.mxu0 %v443
    %453 = vmatpush.msra.mxu0 %v442
    %454 = vmatpush.msra.mxu0 %v441
    %455 = vmatpush.msra.mxu0 %v440
    %456 = vmatpush.msra.mxu0 %v439
    %457 = vmatpush.msra.mxu0 %v438
    %458 = vmatpush.msra.mxu0 %v437
    %459 = vmatpush.msra.mxu0 %v436
    %460 = vmatpush.msra.mxu0 %v435
    %461 = vmatpush.msra.mxu0 %v434
    %462 = vmatpush.msra.mxu0 %v433
    %463 = vmatpush.msra.mxu0 %v432
    %464 = vmatmul.f32.gmra.mxu0 %v416
    %v465 = vpop.f32.mrf.mxu0
    %v466 = vadd.f32 0.0, %v465
    %467 = vmatmul.f32.gmra.mxu0 %v417
    %v468 = vpop.f32.mrf.mxu0
    %v469 = vadd.f32 0.0, %v468
    %470 = vmatmul.f32.gmra.mxu0 %v418
    %v471 = vpop.f32.mrf.mxu0
    %v472 = vadd.f32 0.0, %v471
    %473 = vmatmul.f32.gmra.mxu0 %v419
    %v474 = vpop.f32.mrf.mxu0
    %v475 = vadd.f32 0.0, %v474
    %476 = vmatmul.f32.gmra.mxu0 %v420
    %v477 = vpop.f32.mrf.mxu0
    %v478 = vadd.f32 0.0, %v477
    %479 = vmatmul.f32.gmra.mxu0 %v421
    %v480 = vpop.f32.mrf.mxu0
    %v481 = vadd.f32 0.0, %v480
    %482 = vmatmul.f32.gmra.mxu0 %v422
    %v483 = vpop.f32.mrf.mxu0
    %v484 = vadd.f32 0.0, %v483
    %485 = vmatmul.f32.gmra.mxu0 %v423
    %v486 = vpop.f32.mrf.mxu0
    %v487 = vadd.f32 0.0, %v486
    %488 = vmatmul.f32.gmra.mxu0 %v424
    %v489 = vpop.f32.mrf.mxu0
    %v490 = vadd.f32 0.0, %v489
    %491 = vmatmul.f32.gmra.mxu0 %v425
    %v492 = vpop.f32.mrf.mxu0
    %v493 = vadd.f32 0.0, %v492
    %494 = vmatmul.f32.gmra.mxu0 %v426
    %v495 = vpop.f32.mrf.mxu0
    %v496 = vadd.f32 0.0, %v495
    %497 = vmatmul.f32.gmra.mxu0 %v427
    %v498 = vpop.f32.mrf.mxu0
    %v499 = vadd.f32 0.0, %v498
    %500 = vmatmul.f32.gmra.mxu0 %v428
    %v501 = vpop.f32.mrf.mxu0
    %v502 = vadd.f32 0.0, %v501
    %503 = vmatmul.f32.gmra.mxu0 %v429
    %v504 = vpop.f32.mrf.mxu0
    %v505 = vadd.f32 0.0, %v504
    %506 = vmatmul.f32.gmra.mxu0 %v430
    %v507 = vpop.f32.mrf.mxu0
    %v508 = vadd.f32 0.0, %v507
    %509 = vmatmul.f32.gmra.mxu0 %v431
    %v510 = vpop.f32.mrf.mxu0
    %v511 = vadd.f32 0.0, %v510
    %512 = vdwg.mxu0
    %v513 = vld [vmem:[%s5] sm:$0x1]
    %v515 = vperm.slane %v513, 0
    %v517 = vmul.f32 %v466, %v515
    %v518 = vmul.f32 %v469, %v515
    %v519 = vmul.f32 %v472, %v515
    %v520 = vmul.f32 %v475, %v515
    %v521 = vmul.f32 %v478, %v515
    %v522 = vmul.f32 %v481, %v515
    %v523 = vmul.f32 %v484, %v515
    %v524 = vmul.f32 %v487, %v515
    %v525 = vmul.f32 %v490, %v515
    %v526 = vmul.f32 %v493, %v515
    %v527 = vmul.f32 %v496, %v515
    %v528 = vmul.f32 %v499, %v515
    %v529 = vmul.f32 %v502, %v515
    %v530 = vmul.f32 %v505, %v515
    %v531 = vmul.f32 %v508, %v515
    %v532 = vmul.f32 %v511, %v515
    %v533 = vld [vmem:[#allocation11] sm:$0x1]
    %v535 = vperm.slane %v533, 0
    %v537 = vadd.f32 %v517, %v535
    %v538 = vadd.f32 %v518, %v535
    %v539 = vadd.f32 %v519, %v535
    %v540 = vadd.f32 %v520, %v535
    %v541 = vadd.f32 %v521, %v535
    %v542 = vadd.f32 %v522, %v535
    %v543 = vadd.f32 %v523, %v535
    %v544 = vadd.f32 %v524, %v535
    %v545 = vadd.f32 %v525, %v535
    %v546 = vadd.f32 %v526, %v535
    %v547 = vadd.f32 %v527, %v535
    %v548 = vadd.f32 %v528, %v535
    %v549 = vadd.f32 %v529, %v535
    %v550 = vadd.f32 %v530, %v535
    %v551 = vadd.f32 %v531, %v535
    %v552 = vadd.f32 %v532, %v535
    %v553 = vmax.f32 %v537, 0.0
    %v554 = vmax.f32 %v538, 0.0
    %v555 = vmax.f32 %v539, 0.0
    %v556 = vmax.f32 %v540, 0.0
    %v557 = vmax.f32 %v541, 0.0
    %v558 = vmax.f32 %v542, 0.0
    %v559 = vmax.f32 %v543, 0.0
    %v560 = vmax.f32 %v544, 0.0
    %v561 = vmax.f32 %v545, 0.0
    %v562 = vmax.f32 %v546, 0.0
    %v563 = vmax.f32 %v547, 0.0
    %v564 = vmax.f32 %v548, 0.0
    %v565 = vmax.f32 %v549, 0.0
    %v566 = vmax.f32 %v550, 0.0
    %v567 = vmax.f32 %v551, 0.0
    %v568 = vmax.f32 %v552, 0.0
    %v569 = vadd.f32 %v553, %v416
    %v570 = vadd.f32 %v554, %v417
    %v571 = vadd.f32 %v555, %v418
    %v572 = vadd.f32 %v556, %v419
    %v573 = vadd.f32 %v557, %v420
    %v574 = vadd.f32 %v558, %v421
    %v575 = vadd.f32 %v559, %v422
    %v576 = vadd.f32 %v560, %v423
    %v577 = vadd.f32 %v561, %v424
    %v578 = vadd.f32 %v562, %v425
    %v579 = vadd.f32 %v563, %v426
    %v580 = vadd.f32 %v564, %v427
    %v581 = vadd.f32 %v565, %v428
    %v582 = vadd.f32 %v566, %v429
    %v583 = vadd.f32 %v567, %v430
    %v584 = vadd.f32 %v568, %v431
    %s585 = scalar_lea.vmem [#allocation10], 128
    %v586 = vld [vmem:[%s585] sm:$0xff]
    %v587 = vld [vmem:[%s585 + $0x8] sm:$0xff]
    %v588 = vld [vmem:[%s585 + $0x10] sm:$0xff]
    %v589 = vld [vmem:[%s585 + $0x18] sm:$0xff]
    %v590 = vld [vmem:[%s585 + $0x20] sm:$0xff]
    %v591 = vld [vmem:[%s585 + $0x28] sm:$0xff]
    %v592 = vld [vmem:[%s585 + $0x30] sm:$0xff]
    %v593 = vld [vmem:[%s585 + $0x38] sm:$0xff]
    %v594 = vld [vmem:[%s585 + $0x40] sm:$0xff]
    %v595 = vld [vmem:[%s585 + $0x48] sm:$0xff]
    %v596 = vld [vmem:[%s585 + $0x50] sm:$0xff]
    %v597 = vld [vmem:[%s585 + $0x58] sm:$0xff]
    %v598 = vld [vmem:[%s585 + $0x60] sm:$0xff]
    %v599 = vld [vmem:[%s585 + $0x68] sm:$0xff]
    %v600 = vld [vmem:[%s585 + $0x70] sm:$0xff]
    %v601 = vld [vmem:[%s585 + $0x78] sm:$0xff]
    %602 = vmatpush.msra.mxu0 %v601
    %603 = vmatpush.msra.mxu0 %v600
    %604 = vmatpush.msra.mxu0 %v599
    %605 = vmatpush.msra.mxu0 %v598
    %606 = vmatpush.msra.mxu0 %v597
    %607 = vmatpush.msra.mxu0 %v596
    %608 = vmatpush.msra.mxu0 %v595
    %609 = vmatpush.msra.mxu0 %v594
    %610 = vmatpush.msra.mxu0 %v593
    %611 = vmatpush.msra.mxu0 %v592
    %612 = vmatpush.msra.mxu0 %v591
    %613 = vmatpush.msra.mxu0 %v590
    %614 = vmatpush.msra.mxu0 %v589
    %615 = vmatpush.msra.mxu0 %v588
    %616 = vmatpush.msra.mxu0 %v587
    %617 = vmatpush.msra.mxu0 %v586
    %618 = vmatmul.f32.gmra.mxu0 %v569
    %v619 = vpop.f32.mrf.mxu0
    %v620 = vadd.f32 0.0, %v619
    %621 = vmatmul.f32.gmra.mxu0 %v570
    %v622 = vpop.f32.mrf.mxu0
    %v623 = vadd.f32 0.0, %v622
    %624 = vmatmul.f32.gmra.mxu0 %v571
    %v625 = vpop.f32.mrf.mxu0
    %v626 = vadd.f32 0.0, %v625
    %627 = vmatmul.f32.gmra.mxu0 %v572
    %v628 = vpop.f32.mrf.mxu0
    %v629 = vadd.f32 0.0, %v628
    %630 = vmatmul.f32.gmra.mxu0 %v573
    %v631 = vpop.f32.mrf.mxu0
    %v632 = vadd.f32 0.0, %v631
    %633 = vmatmul.f32.gmra.mxu0 %v574
    %v634 = vpop.f32.mrf.mxu0
    %v635 = vadd.f32 0.0, %v634
    %636 = vmatmul.f32.gmra.mxu0 %v575
    %v637 = vpop.f32.mrf.mxu0
    %v638 = vadd.f32 0.0, %v637
    %639 = vmatmul.f32.gmra.mxu0 %v576
    %v640 = vpop.f32.mrf.mxu0
    %v641 = vadd.f32 0.0, %v640
    %642 = vmatmul.f32.gmra.mxu0 %v577
    %v643 = vpop.f32.mrf.mxu0
    %v644 = vadd.f32 0.0, %v643
    %645 = vmatmul.f32.gmra.mxu0 %v578
    %v646 = vpop.f32.mrf.mxu0
    %v647 = vadd.f32 0.0, %v646
    %648 = vmatmul.f32.gmra.mxu0 %v579
    %v649 = vpop.f32.mrf.mxu0
    %v650 = vadd.f32 0.0, %v649
    %651 = vmatmul.f32.gmra.mxu0 %v580
    %v652 = vpop.f32.mrf.mxu0
    %v653 = vadd.f32 0.0, %v652
    %654 = vmatmul.f32.gmra.mxu0 %v581
    %v655 = vpop.f32.mrf.mxu0
    %v656 = vadd.f32 0.0, %v655
    %657 = vmatmul.f32.gmra.mxu0 %v582
    %v658 = vpop.f32.mrf.mxu0
    %v659 = vadd.f32 0.0, %v658
    %660 = vmatmul.f32.gmra.mxu0 %v583
    %v661 = vpop.f32.mrf.mxu0
    %v662 = vadd.f32 0.0, %v661
    %663 = vmatmul.f32.gmra.mxu0 %v584
    %v664 = vpop.f32.mrf.mxu0
    %v665 = vadd.f32 0.0, %v664
    %666 = vdwg.mxu0
    %s667 = scalar_lea.vmem %s5, 1
    %v668 = vld [vmem:[%s667] sm:$0x1]
    %v670 = vperm.slane %v668, 0
    %v672 = vmul.f32 %v620, %v670
    %v673 = vmul.f32 %v623, %v670
    %v674 = vmul.f32 %v626, %v670
    %v675 = vmul.f32 %v629, %v670
    %v676 = vmul.f32 %v632, %v670
    %v677 = vmul.f32 %v635, %v670
    %v678 = vmul.f32 %v638, %v670
    %v679 = vmul.f32 %v641, %v670
    %v680 = vmul.f32 %v644, %v670
    %v681 = vmul.f32 %v647, %v670
    %v682 = vmul.f32 %v650, %v670
    %v683 = vmul.f32 %v653, %v670
    %v684 = vmul.f32 %v656, %v670
    %v685 = vmul.f32 %v659, %v670
    %v686 = vmul.f32 %v662, %v670
    %v687 = vmul.f32 %v665, %v670
    %s688 = scalar_lea.vmem [#allocation11], 1
    %v689 = vld [vmem:[%s688] sm:$0x1]
    %v691 = vperm.slane %v689, 0
    %v693 = vadd.f32 %v672, %v691
    %v694 = vadd.f32 %v673, %v691
    %v695 = vadd.f32 %v674, %v691
    %v696 = vadd.f32 %v675, %v691
    %v697 = vadd.f32 %v676, %v691
    %v698 = vadd.f32 %v677, %v691
    %v699 = vadd.f32 %v678, %v691
    %v700 = vadd.f32 %v679, %v691
    %v701 = vadd.f32 %v680, %v691
    %v702 = vadd.f32 %v681, %v691
    %v703 = vadd.f32 %v682, %v691
    %v704 = vadd.f32 %v683, %v691
    %v705 = vadd.f32 %v684, %v691
    %v706 = vadd.f32 %v685, %v691
    %v707 = vadd.f32 %v686, %v691
    %v708 = vadd.f32 %v687, %v691
    %v709 = vmax.f32 %v693, 0.0
    %v710 = vmax.f32 %v694, 0.0
    %v711 = vmax.f32 %v695, 0.0
    %v712 = vmax.f32 %v696, 0.0
    %v713 = vmax.f32 %v697, 0.0
    %v714 = vmax.f32 %v698, 0.0
    %v715 = vmax.f32 %v699, 0.0
    %v716 = vmax.f32 %v700, 0.0
    %v717 = vmax.f32 %v701, 0.0
    %v718 = vmax.f32 %v702, 0.0
    %v719 = vmax.f32 %v703, 0.0
    %v720 = vmax.f32 %v704, 0.0
    %v721 = vmax.f32 %v705, 0.0
    %v722 = vmax.f32 %v706, 0.0
    %v723 = vmax.f32 %v707, 0.0
    %v724 = vmax.f32 %v708, 0.0
    %v725 = vadd.f32 %v709, %v569
    %v726 = vadd.f32 %v710, %v570
    %v727 = vadd.f32 %v711, %v571
    %v728 = vadd.f32 %v712, %v572
    %v729 = vadd.f32 %v713, %v573
    %v730 = vadd.f32 %v714, %v574
    %v731 = vadd.f32 %v715, %v575
    %v732 = vadd.f32 %v716, %v576
    %v733 = vadd.f32 %v717, %v577
    %v734 = vadd.f32 %v718, %v578
    %v735 = vadd.f32 %v719, %v579
    %v736 = vadd.f32 %v720, %v580
    %v737 = vadd.f32 %v721, %v581
    %v738 = vadd.f32 %v722, %v582
    %v739 = vadd.f32 %v723, %v583
    %v740 = vadd.f32 %v724, %v584
    %s741 = scalar_lea.vmem [#allocation10], 256
    %v742 = vld [vmem:[%s741] sm:$0xff]
    %v743 = vld [vmem:[%s741 + $0x8] sm:$0xff]
    %v744 = vld [vmem:[%s741 + $0x10] sm:$0xff]
    %v745 = vld [vmem:[%s741 + $0x18] sm:$0xff]
    %v746 = vld [vmem:[%s741 + $0x20] sm:$0xff]
    %v747 = vld [vmem:[%s741 + $0x28] sm:$0xff]
    %v748 = vld [vmem:[%s741 + $0x30] sm:$0xff]
    %v749 = vld [vmem:[%s741 + $0x38] sm:$0xff]
    %v750 = vld [vmem:[%s741 + $0x40] sm:$0xff]
    %v751 = vld [vmem:[%s741 + $0x48] sm:$0xff]
    %v752 = vld [vmem:[%s741 + $0x50] sm:$0xff]
    %v753 = vld [vmem:[%s741 + $0x58] sm:$0xff]
    %v754 = vld [vmem:[%s741 + $0x60] sm:$0xff]
    %v755 = vld [vmem:[%s741 + $0x68] sm:$0xff]
    %v756 = vld [vmem:[%s741 + $0x70] sm:$0xff]
    %v757 = vld [vmem:[%s741 + $0x78] sm:$0xff]
    %758 = vmatpush.msra.mxu0 %v757
    %759 = vmatpush.msra.mxu0 %v756
    %760 = vmatpush.msra.mxu0 %v755
    %761 = vmatpush.msra.mxu0 %v754
    %762 = vmatpush.msra.mxu0 %v753
    %763 = vmatpush.msra.mxu0 %v752
    %764 = vmatpush.msra.mxu0 %v751
    %765 = vmatpush.msra.mxu0 %v750
    %766 = vmatpush.msra.mxu0 %v749
    %767 = vmatpush.msra.mxu0 %v748
    %768 = vmatpush.msra.mxu0 %v747
    %769 = vmatpush.msra.mxu0 %v746
    %770 = vmatpush.msra.mxu0 %v745
    %771 = vmatpush.msra.mxu0 %v744
    %772 = vmatpush.msra.mxu0 %v743
    %773 = vmatpush.msra.mxu0 %v742
    %774 = vmatmul.f32.gmra.mxu0 %v725
    %v775 = vpop.f32.mrf.mxu0
    %v776 = vadd.f32 0.0, %v775
    %777 = vmatmul.f32.gmra.mxu0 %v726
    %v778 = vpop.f32.mrf.mxu0
    %v779 = vadd.f32 0.0, %v778
    %780 = vmatmul.f32.gmra.mxu0 %v727
    %v781 = vpop.f32.mrf.mxu0
    %v782 = vadd.f32 0.0, %v781
    %783 = vmatmul.f32.gmra.mxu0 %v728
    %v784 = vpop.f32.mrf.mxu0
    %v785 = vadd.f32 0.0, %v784
    %786 = vmatmul.f32.gmra.mxu0 %v729
    %v787 = vpop.f32.mrf.mxu0
    %v788 = vadd.f32 0.0, %v787
    %789 = vmatmul.f32.gmra.mxu0 %v730
    %v790 = vpop.f32.mrf.mxu0
    %v791 = vadd.f32 0.0, %v790
    %792 = vmatmul.f32.gmra.mxu0 %v731
    %v793 = vpop.f32.mrf.mxu0
    %v794 = vadd.f32 0.0, %v793
    %795 = vmatmul.f32.gmra.mxu0 %v732
    %v796 = vpop.f32.mrf.mxu0
    %v797 = vadd.f32 0.0, %v796
    %798 = vmatmul.f32.gmra.mxu0 %v733
    %v799 = vpop.f32.mrf.mxu0
    %v800 = vadd.f32 0.0, %v799
    %801 = vmatmul.f32.gmra.mxu0 %v734
    %v802 = vpop.f32.mrf.mxu0
    %v803 = vadd.f32 0.0, %v802
    %804 = vmatmul.f32.gmra.mxu0 %v735
    %v805 = vpop.f32.mrf.mxu0
    %v806 = vadd.f32 0.0, %v805
    %807 = vmatmul.f32.gmra.mxu0 %v736
    %v808 = vpop.f32.mrf.mxu0
    %v809 = vadd.f32 0.0, %v808
    %810 = vmatmul.f32.gmra.mxu0 %v737
    %v811 = vpop.f32.mrf.mxu0
    %v812 = vadd.f32 0.0, %v811
    %813 = vmatmul.f32.gmra.mxu0 %v738
    %v814 = vpop.f32.mrf.mxu0
    %v815 = vadd.f32 0.0, %v814
    %816 = vmatmul.f32.gmra.mxu0 %v739
    %v817 = vpop.f32.mrf.mxu0
    %v818 = vadd.f32 0.0, %v817
    %819 = vmatmul.f32.gmra.mxu0 %v740
    %v820 = vpop.f32.mrf.mxu0
    %v821 = vadd.f32 0.0, %v820
    %822 = vdwg.mxu0
    %s823 = scalar_lea.vmem %s5, 2
    %v824 = vld [vmem:[%s823] sm:$0x1]
    %v826 = vperm.slane %v824, 0
    %v828 = vmul.f32 %v776, %v826
    %v829 = vmul.f32 %v779, %v826
    %v830 = vmul.f32 %v782, %v826
    %v831 = vmul.f32 %v785, %v826
    %v832 = vmul.f32 %v788, %v826
    %v833 = vmul.f32 %v791, %v826
    %v834 = vmul.f32 %v794, %v826
    %v835 = vmul.f32 %v797, %v826
    %v836 = vmul.f32 %v800, %v826
    %v837 = vmul.f32 %v803, %v826
    %v838 = vmul.f32 %v806, %v826
    %v839 = vmul.f32 %v809, %v826
    %v840 = vmul.f32 %v812, %v826
    %v841 = vmul.f32 %v815, %v826
    %v842 = vmul.f32 %v818, %v826
    %v843 = vmul.f32 %v821, %v826
    %s844 = scalar_lea.vmem [#allocation11], 2
    %v845 = vld [vmem:[%s844] sm:$0x1]
    %v847 = vperm.slane %v845, 0
    %v849 = vadd.f32 %v828, %v847
    %v850 = vadd.f32 %v829, %v847
    %v851 = vadd.f32 %v830, %v847
    %v852 = vadd.f32 %v831, %v847
    %v853 = vadd.f32 %v832, %v847
    %v854 = vadd.f32 %v833, %v847
    %v855 = vadd.f32 %v834, %v847
    %v856 = vadd.f32 %v835, %v847
    %v857 = vadd.f32 %v836, %v847
    %v858 = vadd.f32 %v837, %v847
    %v859 = vadd.f32 %v838, %v847
    %v860 = vadd.f32 %v839, %v847
    %v861 = vadd.f32 %v840, %v847
    %v862 = vadd.f32 %v841, %v847
    %v863 = vadd.f32 %v842, %v847
    %v864 = vadd.f32 %v843, %v847
    %v865 = vmax.f32 %v849, 0.0
    %v866 = vmax.f32 %v850, 0.0
    %v867 = vmax.f32 %v851, 0.0
    %v868 = vmax.f32 %v852, 0.0
    %v869 = vmax.f32 %v853, 0.0
    %v870 = vmax.f32 %v854, 0.0
    %v871 = vmax.f32 %v855, 0.0
    %v872 = vmax.f32 %v856, 0.0
    %v873 = vmax.f32 %v857, 0.0
    %v874 = vmax.f32 %v858, 0.0
    %v875 = vmax.f32 %v859, 0.0
    %v876 = vmax.f32 %v860, 0.0
    %v877 = vmax.f32 %v861, 0.0
    %v878 = vmax.f32 %v862, 0.0
    %v879 = vmax.f32 %v863, 0.0
    %v880 = vmax.f32 %v864, 0.0
    %v881 = vadd.f32 %v865, %v725
    %v882 = vadd.f32 %v866, %v726
    %v883 = vadd.f32 %v867, %v727
    %v884 = vadd.f32 %v868, %v728
    %v885 = vadd.f32 %v869, %v729
    %v886 = vadd.f32 %v870, %v730
    %v887 = vadd.f32 %v871, %v731
    %v888 = vadd.f32 %v872, %v732
    %v889 = vadd.f32 %v873, %v733
    %v890 = vadd.f32 %v874, %v734
    %v891 = vadd.f32 %v875, %v735
    %v892 = vadd.f32 %v876, %v736
    %v893 = vadd.f32 %v877, %v737
    %v894 = vadd.f32 %v878, %v738
    %v895 = vadd.f32 %v879, %v739
    %v896 = vadd.f32 %v880, %v740
    %s897 = scalar_lea.vmem [#allocation10], 384
    %v898 = vld [vmem:[%s897] sm:$0xff]
    %v899 = vld [vmem:[%s897 + $0x8] sm:$0xff]
    %v900 = vld [vmem:[%s897 + $0x10] sm:$0xff]
    %v901 = vld [vmem:[%s897 + $0x18] sm:$0xff]
    %v902 = vld [vmem:[%s897 + $0x20] sm:$0xff]
    %v903 = vld [vmem:[%s897 + $0x28] sm:$0xff]
    %v904 = vld [vmem:[%s897 + $0x30] sm:$0xff]
    %v905 = vld [vmem:[%s897 + $0x38] sm:$0xff]
    %v906 = vld [vmem:[%s897 + $0x40] sm:$0xff]
    %v907 = vld [vmem:[%s897 + $0x48] sm:$0xff]
    %v908 = vld [vmem:[%s897 + $0x50] sm:$0xff]
    %v909 = vld [vmem:[%s897 + $0x58] sm:$0xff]
    %v910 = vld [vmem:[%s897 + $0x60] sm:$0xff]
    %v911 = vld [vmem:[%s897 + $0x68] sm:$0xff]
    %v912 = vld [vmem:[%s897 + $0x70] sm:$0xff]
    %v913 = vld [vmem:[%s897 + $0x78] sm:$0xff]
    %914 = vmatpush.msra.mxu0 %v913
    %915 = vmatpush.msra.mxu0 %v912
    %916 = vmatpush.msra.mxu0 %v911
    %917 = vmatpush.msra.mxu0 %v910
    %918 = vmatpush.msra.mxu0 %v909
    %919 = vmatpush.msra.mxu0 %v908
    %920 = vmatpush.msra.mxu0 %v907
    %921 = vmatpush.msra.mxu0 %v906
    %922 = vmatpush.msra.mxu0 %v905
    %923 = vmatpush.msra.mxu0 %v904
    %924 = vmatpush.msra.mxu0 %v903
    %925 = vmatpush.msra.mxu0 %v902
    %926 = vmatpush.msra.mxu0 %v901
    %927 = vmatpush.msra.mxu0 %v900
    %928 = vmatpush.msra.mxu0 %v899
    %929 = vmatpush.msra.mxu0 %v898
    %930 = vmatmul.f32.gmra.mxu0 %v881
    %v931 = vpop.f32.mrf.mxu0
    %v932 = vadd.f32 0.0, %v931
    %933 = vmatmul.f32.gmra.mxu0 %v882
    %v934 = vpop.f32.mrf.mxu0
    %v935 = vadd.f32 0.0, %v934
    %936 = vmatmul.f32.gmra.mxu0 %v883
    %v937 = vpop.f32.mrf.mxu0
    %v938 = vadd.f32 0.0, %v937
    %939 = vmatmul.f32.gmra.mxu0 %v884
    %v940 = vpop.f32.mrf.mxu0
    %v941 = vadd.f32 0.0, %v940
    %942 = vmatmul.f32.gmra.mxu0 %v885
    %v943 = vpop.f32.mrf.mxu0
    %v944 = vadd.f32 0.0, %v943
    %945 = vmatmul.f32.gmra.mxu0 %v886
    %v946 = vpop.f32.mrf.mxu0
    %v947 = vadd.f32 0.0, %v946
    %948 = vmatmul.f32.gmra.mxu0 %v887
    %v949 = vpop.f32.mrf.mxu0
    %v950 = vadd.f32 0.0, %v949
    %951 = vmatmul.f32.gmra.mxu0 %v888
    %v952 = vpop.f32.mrf.mxu0
    %v953 = vadd.f32 0.0, %v952
    %954 = vmatmul.f32.gmra.mxu0 %v889
    %v955 = vpop.f32.mrf.mxu0
    %v956 = vadd.f32 0.0, %v955
    %957 = vmatmul.f32.gmra.mxu0 %v890
    %v958 = vpop.f32.mrf.mxu0
    %v959 = vadd.f32 0.0, %v958
    %960 = vmatmul.f32.gmra.mxu0 %v891
    %v961 = vpop.f32.mrf.mxu0
    %v962 = vadd.f32 0.0, %v961
    %963 = vmatmul.f32.gmra.mxu0 %v892
    %v964 = vpop.f32.mrf.mxu0
    %v965 = vadd.f32 0.0, %v964
    %966 = vmatmul.f32.gmra.mxu0 %v893
    %v967 = vpop.f32.mrf.mxu0
    %v968 = vadd.f32 0.0, %v967
    %969 = vmatmul.f32.gmra.mxu0 %v894
    %v970 = vpop.f32.mrf.mxu0
    %v971 = vadd.f32 0.0, %v970
    %972 = vmatmul.f32.gmra.mxu0 %v895
    %v973 = vpop.f32.mrf.mxu0
    %v974 = vadd.f32 0.0, %v973
    %975 = vmatmul.f32.gmra.mxu0 %v896
    %v976 = vpop.f32.mrf.mxu0
    %v977 = vadd.f32 0.0, %v976
    %978 = vdwg.mxu0
    %s979 = scalar_lea.vmem %s5, 3
    %v980 = vld [vmem:[%s979] sm:$0x1]
    %v982 = vperm.slane %v980, 0
    %v984 = vmul.f32 %v932, %v982
    %v985 = vmul.f32 %v935, %v982
    %v986 = vmul.f32 %v938, %v982
    %v987 = vmul.f32 %v941, %v982
    %v988 = vmul.f32 %v944, %v982
    %v989 = vmul.f32 %v947, %v982
    %v990 = vmul.f32 %v950, %v982
    %v991 = vmul.f32 %v953, %v982
    %v992 = vmul.f32 %v956, %v982
    %v993 = vmul.f32 %v959, %v982
    %v994 = vmul.f32 %v962, %v982
    %v995 = vmul.f32 %v965, %v982
    %v996 = vmul.f32 %v968, %v982
    %v997 = vmul.f32 %v971, %v982
    %v998 = vmul.f32 %v974, %v982
    %v999 = vmul.f32 %v977, %v982
    %s1000 = scalar_lea.vmem [#allocation11], 3
    %v1001 = vld [vmem:[%s1000] sm:$0x1]
    %v1003 = vperm.slane %v1001, 0
    %v1005 = vadd.f32 %v984, %v1003
    %v1006 = vadd.f32 %v985, %v1003
    %v1007 = vadd.f32 %v986, %v1003
    %v1008 = vadd.f32 %v987, %v1003
    %v1009 = vadd.f32 %v988, %v1003
    %v1010 = vadd.f32 %v989, %v1003
    %v1011 = vadd.f32 %v990, %v1003
    %v1012 = vadd.f32 %v991, %v1003
    %v1013 = vadd.f32 %v992, %v1003
    %v1014 = vadd.f32 %v993, %v1003
    %v1015 = vadd.f32 %v994, %v1003
    %v1016 = vadd.f32 %v995, %v1003
    %v1017 = vadd.f32 %v996, %v1003
    %v1018 = vadd.f32 %v997, %v1003
    %v1019 = vadd.f32 %v998, %v1003
    %v1020 = vadd.f32 %v999, %v1003
    %v1021 = vmax.f32 %v1005, 0.0
    %v1022 = vmax.f32 %v1006, 0.0
    %v1023 = vmax.f32 %v1007, 0.0
    %v1024 = vmax.f32 %v1008, 0.0
    %v1025 = vmax.f32 %v1009, 0.0
    %v1026 = vmax.f32 %v1010, 0.0
    %v1027 = vmax.f32 %v1011, 0.0
    %v1028 = vmax.f32 %v1012, 0.0
    %v1029 = vmax.f32 %v1013, 0.0
    %v1030 = vmax.f32 %v1014, 0.0
    %v1031 = vmax.f32 %v1015, 0.0
    %v1032 = vmax.f32 %v1016, 0.0
    %v1033 = vmax.f32 %v1017, 0.0
    %v1034 = vmax.f32 %v1018, 0.0
    %v1035 = vmax.f32 %v1019, 0.0
    %v1036 = vmax.f32 %v1020, 0.0
    %v1037 = vadd.f32 %v1021, %v881
    %v1038 = vadd.f32 %v1022, %v882
    %v1039 = vadd.f32 %v1023, %v883
    %v1040 = vadd.f32 %v1024, %v884
    %v1041 = vadd.f32 %v1025, %v885
    %v1042 = vadd.f32 %v1026, %v886
    %v1043 = vadd.f32 %v1027, %v887
    %v1044 = vadd.f32 %v1028, %v888
    %v1045 = vadd.f32 %v1029, %v889
    %v1046 = vadd.f32 %v1030, %v890
    %v1047 = vadd.f32 %v1031, %v891
    %v1048 = vadd.f32 %v1032, %v892
    %v1049 = vadd.f32 %v1033, %v893
    %v1050 = vadd.f32 %v1034, %v894
    %v1051 = vadd.f32 %v1035, %v895
    %v1052 = vadd.f32 %v1036, %v896
    %v1053 = vmax.f32 %v1037, %v1041
    %v1054 = vmax.f32 %v1038, %v1042
    %v1055 = vmax.f32 %v1039, %v1043
    %v1056 = vmax.f32 %v1040, %v1044
    %v1057 = vmax.f32 %v1053, %v1054
    %v1058 = vmax.f32 %v1055, %v1056
    %v1059 = vmax.f32 %v1057, %v1058
    %v1060 = vrot.slane %v1059, 4
    %v1061 = vmax.f32 %v1059, %v1060
    %v1062 = vrot.slane %v1061, 2
    %v1063 = vmax.f32 %v1061, %v1062
    %v1064 = vrot.slane %v1063, 1
    %v1065 = vmax.f32 %v1063, %v1064
    %v1066 = vmax.f32 %v1045, %v1049
    %v1067 = vmax.f32 %v1046, %v1050
    %v1068 = vmax.f32 %v1047, %v1051
    %v1069 = vmax.f32 %v1048, %v1052
    %v1070 = vmax.f32 %v1066, %v1067
    %v1071 = vmax.f32 %v1068, %v1069
    %v1072 = vmax.f32 %v1070, %v1071
    %v1073 = vrot.slane %v1072, 4
    %v1074 = vmax.f32 %v1072, %v1073
    %v1075 = vrot.slane %v1074, 2
    %v1076 = vmax.f32 %v1074, %v1075
    %v1077 = vrot.slane %v1076, 1
    %v1078 = vmax.f32 %v1076, %v1077
    %vm1079 = vcmask 1040384
    %v1080 = vsel %vm1079, %v1065, %v1078
    %v1081 = vld [vmem:[#allocation13] sm:$0xff]
    %v1082 = vld [vmem:[#allocation13 + $0x8] sm:$0xff]
    %v1083 = vld [vmem:[#allocation13 + $0x10] sm:$0xff]
    %v1084 = vld [vmem:[#allocation13 + $0x18] sm:$0xff]
    %v1085 = vld [vmem:[#allocation13 + $0x20] sm:$0xff]
    %v1086 = vld [vmem:[#allocation13 + $0x28] sm:$0xff]
    %v1087 = vld [vmem:[#allocation13 + $0x30] sm:$0xff]
    %v1088 = vld [vmem:[#allocation13 + $0x38] sm:$0xff]
    %v1089 = vld [vmem:[#allocation13 + $0x40] sm:$0xff]
    %v1090 = vld [vmem:[#allocation13 + $0x48] sm:$0xff]
    %v1091 = vld [vmem:[#allocation13 + $0x50] sm:$0xff]
    %v1092 = vld [vmem:[#allocation13 + $0x58] sm:$0xff]
    %v1093 = vld [vmem:[#allocation13 + $0x60] sm:$0xff]
    %v1094 = vld [vmem:[#allocation13 + $0x68] sm:$0xff]
    %v1095 = vld [vmem:[#allocation13 + $0x70] sm:$0xff]
    %v1096 = vld [vmem:[#allocation13 + $0x78] sm:$0xff]
    %1097 = vmatpush.msra.mxu0 %v1096
    %1098 = vmatpush.msra.mxu0 %v1095
    %1099 = vmatpush.msra.mxu0 %v1094
    %1100 = vmatpush.msra.mxu0 %v1093
    %1101 = vmatpush.msra.mxu0 %v1092
    %1102 = vmatpush.msra.mxu0 %v1091
    %1103 = vmatpush.msra.mxu0 %v1090
    %1104 = vmatpush.msra.mxu0 %v1089
    %1105 = vmatpush.msra.mxu0 %v1088
    %1106 = vmatpush.msra.mxu0 %v1087
    %1107 = vmatpush.msra.mxu0 %v1086
    %1108 = vmatpush.msra.mxu0 %v1085
    %1109 = vmatpush.msra.mxu0 %v1084
    %1110 = vmatpush.msra.mxu0 %v1083
    %1111 = vmatpush.msra.mxu0 %v1082
    %1112 = vmatpush.msra.mxu0 %v1081
    %1113 = vmatmul.f32.gmra.mxu0 %v1080
    %v1114 = vpop.f32.mrf.mxu0
    %v1115 = vadd.f32 0.0, %v1114
    %1116 = vdwg.mxu0
    %1117 = vst [vmem:[#allocation14] sm:$0x3] %v1115
    // Predicated region
    $region62: #{tpu_custom_call.1} parent=1 // pred_check
      _
    $region63: #{tpu_custom_call.1} parent=1 // pred_check_branch
      %1119 = sbr.rel (0) target = $region65
    $region64: #{tpu_custom_call.1} parent=1 // pred_region
      %1121 = vsyncadd [#allocation4], 0
      %s1123 = sshll.u32 [#allocation14], 4
      %s1124 = int_to_ptr.vmem [resolvable:$true] %s1123
      %s1125 = sshll.u32 %s8, 4
      %s1126 = int_to_ptr.hbm [resolvable:$true] %s1125
      %1128 = dma.vmem_to_hbm [thread:$0]  %s1124, 32, %s1126, [#allocation4]
    $region65: #{tpu_custom_call.1} parent=1 // pred_fallthru
      _
    // Predicated region
    $region66: #{tpu_custom_call.1} parent=1 // pred_check
      _
    $region67: #{tpu_custom_call.1} parent=1 // pred_check_branch
      %1130 = sbr.rel (0) target = $region69
    $region68: #{tpu_custom_call.1} parent=1 // pred_region
      %1132 = dma.done [#allocation4], 32
    $region69: #{tpu_custom_call.1} parent=1 // pred_fallthru
      _
    %1133 = vsyncpa [#allocation3], 1
    %1134 = vsyncpa [#allocation6], 1
    %1135 = vsyncpa [#allocation9], 1
    %1136 = vsyncpa [#allocation12], 1
    %1137 = vsyncpa [#allocation4], 1

</llo_original>
